<compile_context>
chip_gen: v5e
topology: v5e:2x2
jax: 0.10.0
libtpu: 0.0.40
codegen_flags: <defaults>
</compile_context>

<pallas_src>
import functools

import jax
import jax.numpy as jnp
from jax import lax
from jax.experimental import pallas as pl
from jax.experimental.pallas import tpu as pltpu


def _round_up(n, m):
    return ((n + m - 1) // m) * m


def _mlp_logsoftmax_kernel(x_ref, w1_ref, b1_ref, w2_ref, b2_ref, o_ref):
    """fc1 -> relu -> (dropout: eval no-op) -> fc2 -> log_softmax over lane axis."""
    # fc1: plain NN matmul, weights already in (in, out) layout + zero-padded
    # to 128-wide hidden, so vregs are full for the bias+ReLU VPU work.
    x = x_ref[...].astype(jnp.bfloat16)                               # (TB, 256) bf16
    h = jnp.dot(x, w1_ref[...], preferred_element_type=jnp.float32)   # (TB, 128) f32
    h = jnp.maximum(h + b1_ref[...], 0.0)                             # bias + ReLU in f32
    # TODO(synk): nn.Dropout(0.3) is identity in eval mode; training-mode
    # masking would use pltpu.prng_seed / pltpu.prng_random_bits.

    # fc2: (TB, 128) @ (128, 128); padded hidden rows of w2 are zero, padded
    # class columns get bias -1e30 so they vanish in the softmax sum.
    z = jnp.dot(h.astype(jnp.bfloat16), w2_ref[...],
                preferred_element_type=jnp.float32)                   # (TB, 128) f32
    z = z + b2_ref[...]

    # Numerically stable log_softmax over the (padded) class axis. exp/log hit
    # the otherwise-idle EUP slot; everything stays f32. Output is 128 lanes
    # wide -> unmasked vst stores.
    m = jnp.max(z, axis=-1, keepdims=True)
    s = z - m
    lse = jnp.log(jnp.sum(jnp.exp(s), axis=-1, keepdims=True))
    o_ref[...] = s - lse


def prepare_params(w1, b1, w2, b2, *, lane=128):
    """One-time at model init (NOT the per-call hot path).

    - Transpose weights to MXU-native (in, out) layout.
    - Zero-pad hidden 64 -> 128 and classes C -> 128 (lane-dense).
    - b2 padding uses -1e30 (finite) so padded logits never create NaNs.
    - Weights in bf16 for the MXU, biases in f32.
    Returns (w1t, b1p, w2t, b2p) plus the true num_classes.
    """
    w1 = jnp.asarray(w1)   # (64, 256)  PyTorch (out, in)
    b1 = jnp.asarray(b1)   # (64,)
    w2 = jnp.asarray(w2)   # (C, 64)
    b2 = jnp.asarray(b2)   # (C,)

    in_features = w1.shape[1]
    hidden = w1.shape[0]
    num_classes = w2.shape[0]
    hidden_p = _round_up(max(hidden, lane), lane)       # 128
    classes_p = _round_up(max(num_classes, lane), lane)  # 128

    w1t = jnp.zeros((in_features, hidden_p), jnp.bfloat16)
    w1t = w1t.at[:, :hidden].set(jnp.asarray(w1, jnp.bfloat16).T)     # (256, 128)

    b1p = jnp.zeros((1, hidden_p), jnp.float32)
    b1p = b1p.at[0, :hidden].set(jnp.asarray(b1, jnp.float32))        # (1, 128)

    w2t = jnp.zeros((hidden_p, classes_p), jnp.bfloat16)
    w2t = w2t.at[:hidden, :num_classes].set(jnp.asarray(w2, jnp.bfloat16).T)  # (128, 128)

    b2p = jnp.full((1, classes_p), -1e30, jnp.float32)
    b2p = b2p.at[0, :num_classes].set(jnp.asarray(b2, jnp.float32))   # (1, 128)

    return (w1t, b1p, w2t, b2p), num_classes


@functools.partial(jax.jit, static_argnames=("num_classes", "block_b"))
def classification_model_forward(x, params, num_classes, block_b=1024):
    """x: (B, 256) f32 or bf16; params from prepare_params(). Returns (B, C) f32 log-probs."""
    w1, b1, w2, b2 = params
    B = x.shape[0]
    in_features = w1.shape[0]
    classes_p = w2.shape[1]

    # Big tiles amortize the ~0.35us/step pipeline overhead; the round_up(cdiv(B,2),8)
    # guard keeps the grid length >= 2 at large B so "parallel" can shard the
    # batch across v7x's two TensorCores. Always a multiple of 8 rows.
    tb = max(8, min(block_b, _round_up(pl.cdiv(B, 2), 8)))
    grid = (pl.cdiv(B, tb),)

    # Weights/biases: whole array resident in VMEM, grid-invariant (loaded once,
    # no per-step DMA).
    vmem_full = pl.BlockSpec(memory_space=pltpu.MemorySpace.VMEM)

    out_padded = pl.pallas_call(
        _mlp_logsoftmax_kernel,
        out_shape=jax.ShapeDtypeStruct((B, classes_p), jnp.float32),
        grid=grid,
        in_specs=[
            pl.BlockSpec((tb, in_features), lambda i: (i, 0)),   # x: batch-tiled
            vmem_full,   # w1t (256, 128)
            vmem_full,   # b1p (1, 128)
            vmem_full,   # w2t (128, 128)
            vmem_full,   # b2p (1, 128)
        ],
        out_specs=pl.BlockSpec((tb, classes_p), lambda i: (i, 0)),
        compiler_params=pltpu.CompilerParams(
            dimension_semantics=("parallel",)),   # batch axis -> both TCs on v7x
    )(x, w1, b1, w2, b2)

    # Padded classes carry ~-1e30 log-probs; slice them away (tiny wrapper read).
    return out_padded[:, :num_classes]


def _reference_f32(x, w1, b1, w2, b2):
    """Exact PyTorch-semantics (all f32) reference."""
    h = jnp.maximum(x @ w1.T + b1, 0.0)
    z = h @ w2.T + b2
    return jax.nn.log_softmax(z, axis=1)


def _reference_bf16_matmul(x, w1, b1, w2, b2):
    """Same bf16-operand / f32-accumulate recipe as the kernel."""
    h = lax.dot_general(
        x.astype(jnp.bfloat16), w1.astype(jnp.bfloat16),
        (((1,), (1,)), ((), ())), preferred_element_type=jnp.float32) + b1
    h = jnp.maximum(h, 0.0)
    z = lax.dot_general(
        h.astype(jnp.bfloat16), w2.astype(jnp.bfloat16),
        (((1,), (1,)), ((), ())), preferred_element_type=jnp.float32) + b2
    return jax.nn.log_softmax(z, axis=1)


if __name__ == "__main__":
    num_classes = 10
    B = 256   # small, but exercises the batch grid (2 tiles of 128 rows, grid >= 2)

    key = jax.random.PRNGKey(0)
    kx, kw1, kb1, kw2, kb2 = jax.random.split(key, 5)

    # Shapes from nn.Linear(256, 64) / nn.Linear(64, num_classes).
    x = jax.random.normal(kx, (B, 256), jnp.float32)
    w1 = jax.random.normal(kw1, (64, 256), jnp.float32) * 0.05
    b1 = jax.random.normal(kb1, (64,), jnp.float32) * 0.05
    w2 = jax.random.normal(kw2, (num_classes, 64), jnp.float32) * 0.05
    b2 = jax.random.normal(kb2, (num_classes,), jnp.float32) * 0.05

    params, C = prepare_params(w1, b1, w2, b2)
    y = classification_model_forward(x, params, num_classes=C)
    y = jax.block_until_ready(y)

    y_bf16 = _reference_bf16_matmul(x, w1, b1, w2, b2)
    y_f32 = _reference_f32(x, w1, b1, w2, b2)

    assert y.shape == (B, num_classes)
    # Tight check vs. a reference using the identical bf16-matmul / f32-accum math.
    assert jnp.allclose(y, y_bf16, atol=5e-4, rtol=5e-4), "mismatch vs bf16 reference"
    # Loose check vs. the exact f32 PyTorch-semantics reference.
    assert jnp.allclose(y, y_f32, atol=3e-2, rtol=3e-2), "mismatch vs f32 reference"

    # NOTE: at tiny batch a fused jitted-XLA version may match or beat this
    # kernel (fixed custom-call overhead dominates); the Pallas path pays off
    # once the batch grid amortizes it, and bf16 x input halves the only
    # significant HBM stream if the producer can supply it.
    print("KERNEL_OK")
</pallas_src>

<mosaic_0001>
module attributes {stable_mosaic.version = 11 : i64} {
  func.func @_mlp_logsoftmax_kernel(%arg0: i32, %arg1: memref<128x256xf32, #tpu.memory_space<vmem>>, %arg2: memref<256x128xbf16, #tpu.memory_space<vmem>>, %arg3: memref<1x128xf32, #tpu.memory_space<vmem>>, %arg4: memref<128x128xbf16, #tpu.memory_space<vmem>>, %arg5: memref<1x128xf32, #tpu.memory_space<vmem>>, %arg6: memref<128x128xf32, #tpu.memory_space<vmem>>) attributes {dimension_semantics = [#tpu.dimension_semantics<parallel>], iteration_bounds = array<i64: 2>, scalar_prefetch = 0 : i64, scratch_operands = 0 : i64, tpu.core_type = #tpu.core_type<tc>, window_params = [{transform_indices = @transform_0, window_bounds = array<i64: 128, 256>}, {pipeline_mode = #tpu.pipeline_mode<synchronous>, transform_indices = @transform_1, window_bounds = array<i64: 256, 128>}, {pipeline_mode = #tpu.pipeline_mode<synchronous>, transform_indices = @transform_2, window_bounds = array<i64: 1, 128>}, {pipeline_mode = #tpu.pipeline_mode<synchronous>, transform_indices = @transform_3, window_bounds = array<i64: 128, 128>}, {pipeline_mode = #tpu.pipeline_mode<synchronous>, transform_indices = @transform_4, window_bounds = array<i64: 1, 128>}, {transform_indices = @transform_5, window_bounds = array<i64: 128, 128>}]} {
    %c0 = arith.constant 0 : index
    %c0_0 = arith.constant 0 : index
    %0 = vector.load %arg1[%c0, %c0_0] : memref<128x256xf32, #tpu.memory_space<vmem>>, vector<128x256xf32>
    %1 = arith.truncf %0 : vector<128x256xf32> to vector<128x256xbf16>
    %c0_1 = arith.constant 0 : index
    %c0_2 = arith.constant 0 : index
    %2 = vector.load %arg2[%c0_1, %c0_2] : memref<256x128xbf16, #tpu.memory_space<vmem>>, vector<256x128xbf16>
    %cst = arith.constant dense<0.000000e+00> : vector<128x128xf32>
    %3 = tpu.matmul %1, %2, %cst {dimension_numbers = #tpu.dot_dimension_numbers<[1], [0], [0], [1], [0, 0, 1, 1], [], []>} : vector<128x256xbf16>, vector<256x128xbf16>, vector<128x128xf32> -> vector<128x128xf32>
    %c0_3 = arith.constant 0 : index
    %c0_4 = arith.constant 0 : index
    %4 = vector.load %arg3[%c0_3, %c0_4] : memref<1x128xf32, #tpu.memory_space<vmem>>, vector<1x128xf32>
    %5 = vector.broadcast %4 : vector<1x128xf32> to vector<128x128xf32>
    %6 = arith.addf %3, %5 : vector<128x128xf32>
    %cst_5 = arith.constant 0.000000e+00 : f32
    %7 = vector.broadcast %cst_5 : f32 to vector<128x128xf32>
    %8 = arith.maximumf %6, %7 : vector<128x128xf32>
    %9 = arith.truncf %8 : vector<128x128xf32> to vector<128x128xbf16>
    %c0_6 = arith.constant 0 : index
    %c0_7 = arith.constant 0 : index
    %10 = vector.load %arg4[%c0_6, %c0_7] : memref<128x128xbf16, #tpu.memory_space<vmem>>, vector<128x128xbf16>
    %cst_8 = arith.constant dense<0.000000e+00> : vector<128x128xf32>
    %11 = tpu.matmul %9, %10, %cst_8 {dimension_numbers = #tpu.dot_dimension_numbers<[1], [0], [0], [1], [0, 0, 1, 1], [], []>} : vector<128x128xbf16>, vector<128x128xbf16>, vector<128x128xf32> -> vector<128x128xf32>
    %c0_9 = arith.constant 0 : index
    %c0_10 = arith.constant 0 : index
    %12 = vector.load %arg5[%c0_9, %c0_10] : memref<1x128xf32, #tpu.memory_space<vmem>>, vector<1x128xf32>
    %13 = vector.broadcast %12 : vector<1x128xf32> to vector<128x128xf32>
    %14 = arith.addf %11, %13 : vector<128x128xf32>
    %cst_11 = arith.constant dense<0xFF800000> : vector<128xf32>
    %15 = vector.multi_reduction <maximumf>, %14, %cst_11 [1] : vector<128x128xf32> to vector<128xf32>
    %16 = vector.shape_cast %15 : vector<128xf32> to vector<128x1xf32>
    %17 = vector.broadcast %16 : vector<128x1xf32> to vector<128x128xf32>
    %18 = arith.subf %14, %17 : vector<128x128xf32>
    %19 = math.exp %18 : vector<128x128xf32>
    %cst_12 = arith.constant dense<0.000000e+00> : vector<128xf32>
    %20 = vector.multi_reduction <add>, %19, %cst_12 [1] : vector<128x128xf32> to vector<128xf32>
    %21 = vector.shape_cast %20 : vector<128xf32> to vector<128x1xf32>
    %22 = math.log %21 : vector<128x1xf32>
    %23 = vector.broadcast %22 : vector<128x1xf32> to vector<128x128xf32>
    %24 = arith.subf %18, %23 : vector<128x128xf32>
    %c0_13 = arith.constant 0 : index
    %c0_14 = arith.constant 0 : index
    %25 = vector.load %arg6[%c0_13, %c0_14] : memref<128x128xf32, #tpu.memory_space<vmem>>, vector<128x128xf32>
    tpu.vector_store %arg6[%c0_13, %c0_14], %24 {strides = array<i32>} : memref<128x128xf32, #tpu.memory_space<vmem>>, vector<128x128xf32>,
    return
  }
  func.func @transform_0(%arg0: i32) -> (i32, i32) {
    %c0_i32 = arith.constant 0 : i32
    %c0_i32_0 = arith.constant 0 : i32
    return %arg0, %c0_i32 : i32, i32
  }
  func.func @transform_1(%arg0: i32) -> (i32, i32) {
    %c0_i32 = arith.constant 0 : i32
    %c0_i32_0 = arith.constant 0 : i32
    %c0_i32_1 = arith.constant 0 : i32
    return %c0_i32, %c0_i32_0 : i32, i32
  }
  func.func @transform_2(%arg0: i32) -> (i32, i32) {
    %c0_i32 = arith.constant 0 : i32
    %c0_i32_0 = arith.constant 0 : i32
    %c0_i32_1 = arith.constant 0 : i32
    return %c0_i32, %c0_i32_0 : i32, i32
  }
  func.func @transform_3(%arg0: i32) -> (i32, i32) {
    %c0_i32 = arith.constant 0 : i32
    %c0_i32_0 = arith.constant 0 : i32
    %c0_i32_1 = arith.constant 0 : i32
    return %c0_i32, %c0_i32_0 : i32, i32
  }
  func.func @transform_4(%arg0: i32) -> (i32, i32) {
    %c0_i32 = arith.constant 0 : i32
    %c0_i32_0 = arith.constant 0 : i32
    %c0_i32_1 = arith.constant 0 : i32
    return %c0_i32, %c0_i32_0 : i32, i32
  }
  func.func @transform_5(%arg0: i32) -> (i32, i32) {
    %c0_i32 = arith.constant 0 : i32
    %c0_i32_0 = arith.constant 0 : i32
    return %arg0, %c0_i32 : i32, i32
  }
}

</mosaic_0001>

<llo_original>
// kernel: classification_model_forward.1
$region0: #{classification_model_forward.1}
  #allocation0 [shape = 'u32[]', space=smem, size = 0x4, offset = 0x4, fixed_abs, tag = 'smem constant byte address 0x4 - core index']
  #allocation1 [shape = 'u32[72,128]{1,0:T(1,128)}', space=vmem, size = 0x9000, scoped, tag = 'internal scratch']
  %s0 = inlined_call_operand.hbm [shape: f32[256,256], index: 0, kind: input, shape index: {}]
  %s1 = inlined_call_operand.hbm [shape: bf16[256,128], index: 1, kind: input, shape index: {}]
  %s2 = inlined_call_operand.vmem [shape: f32[1,128], index: 2, kind: input, shape index: {}]
  %s3 = inlined_call_operand.hbm [shape: bf16[128,128], index: 3, kind: input, shape index: {}]
  %s4 = inlined_call_operand.vmem [shape: f32[1,128], index: 4, kind: input, shape index: {}]
  %s5 = inlined_call_operand.vmem [shape: f32[256,128], index: 5, kind: output, shape index: {}]
  %s6 = sld [smem:[#allocation0]]
  $region65: #{classification_model_forward.1} parent=0
    _
  %s8 = ssub.s32 1, %s6
  %s9 = scalar_select 0, %s8, %s6
  $region1: #{classification_model_forward.1} parent=0
    #allocation2 [shape = 'u8[262144]{0}', space=vmem, size = 0x40000, scoped, tag = 'input window, operand 0']
    #allocation3 [shape = 's32[2]{0}', space=sflag, size = 0x8, scoped, tag = 'scoped memory for classification_model_forward.1']
    #allocation4 [shape = 'u8[65536]{0}', space=vmem, size = 0x10000, scoped, tag = 'input window, operand 1, single buffered']
    #allocation5 [shape = 's32[1]{0}', space=sflag, size = 0x4, scoped, tag = 'scoped memory for classification_model_forward.1']
    #allocation6 [shape = 'u8[32768]{0}', space=vmem, size = 0x8000, scoped, tag = 'input window, operand 3, single buffered']
    %10 = vsyncpa [#allocation3], 0
    %s11 = scalar_lea.sflag [#allocation3], 1
    %12 = vsyncpa %s11, 0
    %13 = vsyncpa [#allocation5], 0
    loop: start=0, step=1, limit=4
    $region2: #{classification_model_forward.1} parent=1 // loop_pre_header
      _
    $region3: #{classification_model_forward.1} parent=1 // loop_header
      %s15 = sphi 0, %s19
      %p16 = scmp.ge.s32.totalorder %s15, 4
      %s25 = sphi 0, %s27
      %s28 = sphi 0, %s25
      %s29 = sphi 0, %s28
      %s45 = sphi 0, %s29
      %s49 = sphi 0, %s49
      %s51 = sphi 0, %s49
      %s52 = sphi 0, %s51
      %s66 = sphi 0, %s52
      %s70 = sphi 0, %s70
      %s72 = sphi 0, %s70
      %s73 = sphi 0, %s72
      %s87 = sphi 0, %s73
      %s91 = sphi 0, %s91
      %s93 = sphi 0, %s91
      %s94 = sphi 0, %s93
      %s108 = sphi 0, %s94
      %s112 = sphi 0, %s112
      %s114 = sphi 0, %s112
      %s115 = sphi 0, %s114
      %s129 = sphi 0, %s115
      %s135 = sphi 0, %s137
      %s138 = sphi 0, %s135
      %s139 = sphi 0, %s138
      %s155 = sphi 0, %s139
    $region4: #{classification_model_forward.1} parent=1 // loop_header_branch
      %18 = sbr.rel (%p16) target = $region8
    $region5: #{classification_model_forward.1} parent=1 // loop_body
      %s20 = ssub.s32 %s15, 1
      %s21 = ssub.s32 %s15, 2
      %s22 = sadd.s32 %s15, 1
      %s23 = ssub.s32 %s15, %s22
      %p24 = scmp.eq.s32.totalorder %s23, 0
      %s26 = sadd.s32 %s25, 1
      %s27 = scalar_select %p24, %s25, %s26
      %p30 = pneg %p24
      %p31 = scmp.eq.s32.totalorder %s15, 1
      %p32 = por %p30, %p31
      %p33 = scmp.ne.s32.totalorder %s25, %s28
      %p34 = scmp.eq.s32.totalorder %s15, 0
      %p35 = por %p33, %p34
      %p36 = scmp.ne.s32.totalorder %s25, %s28
      %p37 = scmp.eq.s32.totalorder %s20, 1
      %p38 = por %p36, %p37
      %p39 = scmp.ne.s32.totalorder %s28, %s29
      %p40 = scmp.eq.s32.totalorder %s20, 0
      %p41 = por %p39, %p40
      %p42 = scmp.ne.s32.totalorder %s28, %s29
      %p43 = scmp.eq.s32.totalorder %s21, 1
      %p44 = por %p42, %p43
      %p46 = scmp.ne.s32.totalorder %s29, %s45
      %p47 = scmp.eq.s32.totalorder %s21, 0
      %p48 = por %p46, %p47
      %s50 = sadd.s32 %s49, 1
      %p53 = scmp.eq.s32.totalorder %s15, 1
      %p54 = scmp.ne.s32.totalorder %s49, %s51
      %p55 = scmp.eq.s32.totalorder %s15, 0
      %p56 = por %p54, %p55
      %p57 = scmp.ne.s32.totalorder %s49, %s51
      %p58 = scmp.eq.s32.totalorder %s20, 1
      %p59 = por %p57, %p58
      %p60 = scmp.ne.s32.totalorder %s51, %s52
      %p61 = scmp.eq.s32.totalorder %s20, 0
      %p62 = por %p60, %p61
      %p63 = scmp.ne.s32.totalorder %s51, %s52
      %p64 = scmp.eq.s32.totalorder %s21, 1
      %p65 = por %p63, %p64
      %p67 = scmp.ne.s32.totalorder %s52, %s66
      %p68 = scmp.eq.s32.totalorder %s21, 0
      %p69 = por %p67, %p68
      %s71 = sadd.s32 %s70, 1
      %p74 = scmp.eq.s32.totalorder %s15, 1
      %p75 = scmp.ne.s32.totalorder %s70, %s72
      %p76 = scmp.eq.s32.totalorder %s15, 0
      %p77 = por %p75, %p76
      %p78 = scmp.ne.s32.totalorder %s70, %s72
      %p79 = scmp.eq.s32.totalorder %s20, 1
      %p80 = por %p78, %p79
      %p81 = scmp.ne.s32.totalorder %s72, %s73
      %p82 = scmp.eq.s32.totalorder %s20, 0
      %p83 = por %p81, %p82
      %p84 = scmp.ne.s32.totalorder %s72, %s73
      %p85 = scmp.eq.s32.totalorder %s21, 1
      %p86 = por %p84, %p85
      %p88 = scmp.ne.s32.totalorder %s73, %s87
      %p89 = scmp.eq.s32.totalorder %s21, 0
      %p90 = por %p88, %p89
      %s92 = sadd.s32 %s91, 1
      %p95 = scmp.eq.s32.totalorder %s15, 1
      %p96 = scmp.ne.s32.totalorder %s91, %s93
      %p97 = scmp.eq.s32.totalorder %s15, 0
      %p98 = por %p96, %p97
      %p99 = scmp.ne.s32.totalorder %s91, %s93
      %p100 = scmp.eq.s32.totalorder %s20, 1
      %p101 = por %p99, %p100
      %p102 = scmp.ne.s32.totalorder %s93, %s94
      %p103 = scmp.eq.s32.totalorder %s20, 0
      %p104 = por %p102, %p103
      %p105 = scmp.ne.s32.totalorder %s93, %s94
      %p106 = scmp.eq.s32.totalorder %s21, 1
      %p107 = por %p105, %p106
      %p109 = scmp.ne.s32.totalorder %s94, %s108
      %p110 = scmp.eq.s32.totalorder %s21, 0
      %p111 = por %p109, %p110
      %s113 = sadd.s32 %s112, 1
      %p116 = scmp.eq.s32.totalorder %s15, 1
      %p117 = scmp.ne.s32.totalorder %s112, %s114
      %p118 = scmp.eq.s32.totalorder %s15, 0
      %p119 = por %p117, %p118
      %p120 = scmp.ne.s32.totalorder %s112, %s114
      %p121 = scmp.eq.s32.totalorder %s20, 1
      %p122 = por %p120, %p121
      %p123 = scmp.ne.s32.totalorder %s114, %s115
      %p124 = scmp.eq.s32.totalorder %s20, 0
      %p125 = por %p123, %p124
      %p126 = scmp.ne.s32.totalorder %s114, %s115
      %p127 = scmp.eq.s32.totalorder %s21, 1
      %p128 = por %p126, %p127
      %p130 = scmp.ne.s32.totalorder %s115, %s129
      %p131 = scmp.eq.s32.totalorder %s21, 0
      %p132 = por %p130, %p131
      %s133 = ssub.s32 %s15, %s22
      %p134 = scmp.eq.s32.totalorder %s133, 0
      %s136 = sadd.s32 %s135, 1
      %s137 = scalar_select %p134, %s135, %s136
      %p140 = pneg %p134
      %p141 = scmp.eq.s32.totalorder %s15, 1
      %p142 = por %p140, %p141
      %p143 = scmp.ne.s32.totalorder %s135, %s138
      %p144 = scmp.eq.s32.totalorder %s15, 0
      %p145 = por %p143, %p144
      %p146 = scmp.ne.s32.totalorder %s135, %s138
      %p147 = scmp.eq.s32.totalorder %s20, 1
      %p148 = por %p146, %p147
      %p149 = scmp.ne.s32.totalorder %s138, %s139
      %p150 = scmp.eq.s32.totalorder %s20, 0
      %p151 = por %p149, %p150
      %p152 = scmp.ne.s32.totalorder %s138, %s139
      %p153 = scmp.eq.s32.totalorder %s21, 1
      %p154 = por %p152, %p153
      %p156 = scmp.ne.s32.totalorder %s139, %s155
      %p157 = scmp.eq.s32.totalorder %s21, 0
      %p158 = por %p156, %p157
      %p159 = scmp.le.s32.totalorder 1, %s15
      %p160 = scmp.lt.s32.totalorder %s15, 3
      %p161 = pnand %p159, %p160
      %p162 = pneg %p161
      // Predicated region
      $region9: #{classification_model_forward.1} parent=5 // pred_check
        _
      $region10: #{classification_model_forward.1} parent=5 // pred_check_branch
        %164 = sbr.rel (%p161) target = $region12
      $region11: #{classification_model_forward.1} parent=5 // pred_region
        %s165 = ssub.s32 %s15, 1
        // Predicated region
        $region13: #{classification_model_forward.1} parent=11 // pred_check
          %p166 = pneg %p62
        $region14: #{classification_model_forward.1} parent=11 // pred_check_branch
          %168 = sbr.rel (%p166) target = $region16
        $region15: #{classification_model_forward.1} parent=11 // pred_region
          %170 = vsyncadd [#allocation5], 0
          %s171 = sshll.u32 %s1, 4
          %s172 = int_to_ptr.hbm [resolvable:$true] %s171
          %s173 = sshll.u32 [#allocation4], 4
          %s174 = int_to_ptr.vmem [resolvable:$true] %s173
          %179 = dma.hbm_to_vmem [thread:$0]  %s172, 2048, %s174, [#allocation5], 64, 64, 4
        $region16: #{classification_model_forward.1} parent=11 // pred_fallthru
          _
        // Predicated region
        $region17: #{classification_model_forward.1} parent=11 // pred_check
          %p180 = pneg %p83
        $region18: #{classification_model_forward.1} parent=11 // pred_check_branch
          %182 = sbr.rel (%p180) target = $region20
        $region19: #{classification_model_forward.1} parent=11 // pred_region
          _
        $region20: #{classification_model_forward.1} parent=11 // pred_fallthru
          _
        // Predicated region
        $region21: #{classification_model_forward.1} parent=11 // pred_check
          %p183 = pneg %p104
        $region22: #{classification_model_forward.1} parent=11 // pred_check_branch
          %185 = sbr.rel (%p183) target = $region24
        $region23: #{classification_model_forward.1} parent=11 // pred_region
          %187 = vsyncadd [#allocation5], 0
          %s188 = sshll.u32 %s3, 4
          %s189 = int_to_ptr.hbm [resolvable:$true] %s188
          %s190 = sshll.u32 [#allocation6], 4
          %s191 = int_to_ptr.vmem [resolvable:$true] %s190
          %196 = dma.hbm_to_vmem [thread:$0]  %s189, 1024, %s191, [#allocation5], 64, 64, 4
        $region24: #{classification_model_forward.1} parent=11 // pred_fallthru
          _
        // Predicated region
        $region25: #{classification_model_forward.1} parent=11 // pred_check
          %p197 = pneg %p125
        $region26: #{classification_model_forward.1} parent=11 // pred_check_branch
          %199 = sbr.rel (%p197) target = $region28
        $region27: #{classification_model_forward.1} parent=11 // pred_region
          _
        $region28: #{classification_model_forward.1} parent=11 // pred_fallthru
          _
      $region12: #{classification_model_forward.1} parent=5 // pred_fallthru
        _
      %p200 = scmp.lt.s32.totalorder %s15, 2
      // Predicated region
      $region29: #{classification_model_forward.1} parent=5 // pred_check
        %p201 = pneg %p200
      $region30: #{classification_model_forward.1} parent=5 // pred_check_branch
        %203 = sbr.rel (%p201) target = $region32
      $region31: #{classification_model_forward.1} parent=5 // pred_region
        // Predicated region
        $region33: #{classification_model_forward.1} parent=31 // pred_check
          %p204 = pneg %p35
        $region34: #{classification_model_forward.1} parent=31 // pred_check_branch
          %206 = sbr.rel (%p204) target = $region36
        $region35: #{classification_model_forward.1} parent=31 // pred_region
          %s207 = sand.u32 %s25, 1
          %s208 = scalar_lea.sflag [#allocation3], %s207
          %s209 = sand.u32 %s25, 1
          %s210 = smul.addr %s209, 256
          %s211 = scalar_lea.vmem [#allocation2], %s210
          %s212 = smul.u32 16, %s15
          %214 = vsyncadd %s208, 0
          %s215 = smul.addr %s212, 2
          %s216 = smul.addr %s215, 8
          %s217 = scalar_lea.hbm %s0, %s216
          %s218 = sshll.u32 %s217, 4
          %s219 = int_to_ptr.hbm [resolvable:$true] %s218
          %s220 = sshll.u32 %s211, 4
          %s221 = int_to_ptr.vmem [resolvable:$true] %s220
          %226 = dma.hbm_to_vmem [thread:$0]  %s219, 4096, %s221, %s208, 256, 256, 16
        $region36: #{classification_model_forward.1} parent=31 // pred_fallthru
          _
      $region32: #{classification_model_forward.1} parent=5 // pred_fallthru
        _
      %p227 = scmp.le.s32.totalorder 1, %s15
      %p228 = scmp.lt.s32.totalorder %s15, 3
      %p229 = pnand %p227, %p228
      %p230 = pneg %p229
      // Predicated region
      $region37: #{classification_model_forward.1} parent=5 // pred_check
        _
      $region38: #{classification_model_forward.1} parent=5 // pred_check_branch
        %232 = sbr.rel (%p229) target = $region40
      $region39: #{classification_model_forward.1} parent=5 // pred_region
        %s233 = ssub.s32 %s15, 1
        %s234 = sand.u32 %s28, 1
        %s235 = scalar_lea.sflag [#allocation3], %s234
        %s236 = sand.u32 %s28, 1
        %s237 = smul.addr %s236, 256
        %s238 = scalar_lea.vmem [#allocation2], %s237
        // Predicated region
        $region41: #{classification_model_forward.1} parent=39 // pred_check
          %p239 = pneg %p41
        $region42: #{classification_model_forward.1} parent=39 // pred_check_branch
          %241 = sbr.rel (%p239) target = $region44
        $region43: #{classification_model_forward.1} parent=39 // pred_region
          %243 = dma.done %s235, 4096
        $region44: #{classification_model_forward.1} parent=39 // pred_fallthru
          _
        // Predicated region
        $region45: #{classification_model_forward.1} parent=39 // pred_check
          %p244 = pneg %p62
        $region46: #{classification_model_forward.1} parent=39 // pred_check_branch
          %246 = sbr.rel (%p244) target = $region48
        $region47: #{classification_model_forward.1} parent=39 // pred_region
          %248 = dma.done [#allocation5], 2048
        $region48: #{classification_model_forward.1} parent=39 // pred_fallthru
          _
        // Predicated region
        $region49: #{classification_model_forward.1} parent=39 // pred_check
          %p249 = pneg %p104
        $region50: #{classification_model_forward.1} parent=39 // pred_check_branch
          %251 = sbr.rel (%p249) target = $region52
        $region51: #{classification_model_forward.1} parent=39 // pred_region
          %253 = dma.done [#allocation5], 1024
        $region52: #{classification_model_forward.1} parent=39 // pred_fallthru
          _
        %s254 = sand.u32 %s28, 1
        %s255 = scalar_lea.sflag [#allocation3], %s254
        %s256 = sand.u32 %s28, 1
        %s257 = smul.addr %s256, 256
        %s258 = scalar_lea.vmem [#allocation2], %s257
        %p259 = pneg %p41
        %p260 = pneg %p38
        %p261 = pneg %p62
        %p262 = pneg %p59
        %p263 = pneg %p83
        %p264 = pneg %p80
        %p265 = pneg %p104
        %p266 = pneg %p101
        %p267 = pneg %p125
        %p268 = pneg %p122
        %p269 = pneg %p151
        %p270 = pneg %p148
        %s271 = smul.u32 16, %s20
        %p272 = scmp.lt.s32.totalorder %s271, 31
        %s273 = scalar_select %p272, %s271, 31
        %s274 = smul.addr %s273, 8
        %s275 = scalar_lea.vmem %s5, %s274
        %s276 = smul.u32 16, %s20
        %s277 = smul.u32 16, %s20
        %p278 = scmp.lt.s32.totalorder %s277, 31
        %s279 = scalar_select %p278, %s277, 31
        %s280 = smul.addr %s279, 8
        %s281 = scalar_lea.vmem %s5, %s280
        %s282 = smul.u32 16, %s20
        %v283 = vld [vmem:[%s238] sm:$0xff]
        %v284 = vld [vmem:[%s238 + $0x8] sm:$0xff]
        %v285 = vld [vmem:[%s238 + $0x10] sm:$0xff]
        %v286 = vld [vmem:[%s238 + $0x18] sm:$0xff]
        %v287 = vld [vmem:[%s238 + $0x20] sm:$0xff]
        %v288 = vld [vmem:[%s238 + $0x28] sm:$0xff]
        %v289 = vld [vmem:[%s238 + $0x30] sm:$0xff]
        %v290 = vld [vmem:[%s238 + $0x38] sm:$0xff]
        %v291 = vld [vmem:[%s238 + $0x40] sm:$0xff]
        %v292 = vld [vmem:[%s238 + $0x48] sm:$0xff]
        %v293 = vld [vmem:[%s238 + $0x50] sm:$0xff]
        %v294 = vld [vmem:[%s238 + $0x58] sm:$0xff]
        %v295 = vld [vmem:[%s238 + $0x60] sm:$0xff]
        %v296 = vld [vmem:[%s238 + $0x68] sm:$0xff]
        %v297 = vld [vmem:[%s238 + $0x70] sm:$0xff]
        %v298 = vld [vmem:[%s238 + $0x78] sm:$0xff]
        %v299 = vld [vmem:[%s238 + $0x80] sm:$0xff]
        %v300 = vld [vmem:[%s238 + $0x88] sm:$0xff]
        %v301 = vld [vmem:[%s238 + $0x90] sm:$0xff]
        %v302 = vld [vmem:[%s238 + $0x98] sm:$0xff]
        %v303 = vld [vmem:[%s238 + $0xa0] sm:$0xff]
        %v304 = vld [vmem:[%s238 + $0xa8] sm:$0xff]
        %v305 = vld [vmem:[%s238 + $0xb0] sm:$0xff]
        %v306 = vld [vmem:[%s238 + $0xb8] sm:$0xff]
        %v307 = vld [vmem:[%s238 + $0xc0] sm:$0xff]
        %v308 = vld [vmem:[%s238 + $0xc8] sm:$0xff]
        %v309 = vld [vmem:[%s238 + $0xd0] sm:$0xff]
        %v310 = vld [vmem:[%s238 + $0xd8] sm:$0xff]
        %v311 = vld [vmem:[%s238 + $0xe0] sm:$0xff]
        %v312 = vld [vmem:[%s238 + $0xe8] sm:$0xff]
        %v313 = vld [vmem:[%s238 + $0xf0] sm:$0xff]
        %v314 = vld [vmem:[%s238 + $0xf8] sm:$0xff]
        %v315 = vpack.c.bf16 %v285, %v283
        %v316 = vpack.c.bf16 %v286, %v284
        %v317 = vpack.c.bf16 %v289, %v287
        %v318 = vpack.c.bf16 %v290, %v288
        %v319 = vpack.c.bf16 %v293, %v291
        %v320 = vpack.c.bf16 %v294, %v292
        %v321 = vpack.c.bf16 %v297, %v295
        %v322 = vpack.c.bf16 %v298, %v296
        %v323 = vpack.c.bf16 %v301, %v299
        %v324 = vpack.c.bf16 %v302, %v300
        %v325 = vpack.c.bf16 %v305, %v303
        %v326 = vpack.c.bf16 %v306, %v304
        %v327 = vpack.c.bf16 %v309, %v307
        %v328 = vpack.c.bf16 %v310, %v308
        %v329 = vpack.c.bf16 %v313, %v311
        %v330 = vpack.c.bf16 %v314, %v312
        %v331 = vld [vmem:[#allocation4] sm:$0xf]
        %v332 = vld [vmem:[#allocation4 + $0x4] sm:$0xf]
        %v333 = vld [vmem:[#allocation4 + $0x8] sm:$0xf]
        %v334 = vld [vmem:[#allocation4 + $0xc] sm:$0xf]
        %v335 = vld [vmem:[#allocation4 + $0x10] sm:$0xf]
        %v336 = vld [vmem:[#allocation4 + $0x14] sm:$0xf]
        %v337 = vld [vmem:[#allocation4 + $0x18] sm:$0xf]
        %v338 = vld [vmem:[#allocation4 + $0x1c] sm:$0xf]
        %v339 = vld [vmem:[#allocation4 + $0x20] sm:$0xf]
        %v340 = vld [vmem:[#allocation4 + $0x24] sm:$0xf]
        %v341 = vld [vmem:[#allocation4 + $0x28] sm:$0xf]
        %v342 = vld [vmem:[#allocation4 + $0x2c] sm:$0xf]
        %v343 = vld [vmem:[#allocation4 + $0x30] sm:$0xf]
        %v344 = vld [vmem:[#allocation4 + $0x34] sm:$0xf]
        %v345 = vld [vmem:[#allocation4 + $0x38] sm:$0xf]
        %v346 = vld [vmem:[#allocation4 + $0x3c] sm:$0xf]
        %v347 = vld [vmem:[#allocation4 + $0x40] sm:$0xf]
        %v348 = vld [vmem:[#allocation4 + $0x44] sm:$0xf]
        %v349 = vld [vmem:[#allocation4 + $0x48] sm:$0xf]
        %v350 = vld [vmem:[#allocation4 + $0x4c] sm:$0xf]
        %v351 = vld [vmem:[#allocation4 + $0x50] sm:$0xf]
        %v352 = vld [vmem:[#allocation4 + $0x54] sm:$0xf]
        %v353 = vld [vmem:[#allocation4 + $0x58] sm:$0xf]
        %v354 = vld [vmem:[#allocation4 + $0x5c] sm:$0xf]
        %v355 = vld [vmem:[#allocation4 + $0x60] sm:$0xf]
        %v356 = vld [vmem:[#allocation4 + $0x64] sm:$0xf]
        %v357 = vld [vmem:[#allocation4 + $0x68] sm:$0xf]
        %v358 = vld [vmem:[#allocation4 + $0x6c] sm:$0xf]
        %v359 = vld [vmem:[#allocation4 + $0x70] sm:$0xf]
        %v360 = vld [vmem:[#allocation4 + $0x74] sm:$0xf]
        %v361 = vld [vmem:[#allocation4 + $0x78] sm:$0xf]
        %v362 = vld [vmem:[#allocation4 + $0x7c] sm:$0xf]
        %v363 = vld [vmem:[%s2] sm:$0x1]
        %v365 = vperm.slane %v363, 0
        %v399 = vunpack.c.l.b16 %v331
        %v400 = vunpack.c.l.b16 %v332
        %v401 = vunpack.c.l.b16 %v333
        %v402 = vunpack.c.l.b16 %v334
        %v403 = vunpack.c.l.b16 %v335
        %v404 = vunpack.c.l.b16 %v336
        %v405 = vunpack.c.l.b16 %v337
        %v406 = vunpack.c.l.b16 %v338
        %v407 = vunpack.c.l.b16 %v339
        %v408 = vunpack.c.l.b16 %v340
        %v409 = vunpack.c.l.b16 %v341
        %v410 = vunpack.c.l.b16 %v342
        %v411 = vunpack.c.l.b16 %v343
        %v412 = vunpack.c.l.b16 %v344
        %v413 = vunpack.c.l.b16 %v345
        %v414 = vunpack.c.l.b16 %v346
        %v415 = vunpack.c.l.b16 %v347
        %v416 = vunpack.c.l.b16 %v348
        %v417 = vunpack.c.l.b16 %v349
        %v418 = vunpack.c.l.b16 %v350
        %v419 = vunpack.c.l.b16 %v351
        %v420 = vunpack.c.l.b16 %v352
        %v421 = vunpack.c.l.b16 %v353
        %v422 = vunpack.c.l.b16 %v354
        %v423 = vunpack.c.l.b16 %v355
        %v424 = vunpack.c.l.b16 %v356
        %v425 = vunpack.c.l.b16 %v357
        %v426 = vunpack.c.l.b16 %v358
        %v427 = vunpack.c.l.b16 %v359
        %v428 = vunpack.c.l.b16 %v360
        %v429 = vunpack.c.l.b16 %v361
        %v430 = vunpack.c.l.b16 %v362
        %v431 = vpack.c.b16 %v400, %v399
        %v432 = vpack.c.b16 %v402, %v401
        %v433 = vpack.c.b16 %v404, %v403
        %v434 = vpack.c.b16 %v406, %v405
        %v435 = vpack.c.b16 %v408, %v407
        %v436 = vpack.c.b16 %v410, %v409
        %v437 = vpack.c.b16 %v412, %v411
        %v438 = vpack.c.b16 %v414, %v413
        %v439 = vpack.c.b16 %v416, %v415
        %v440 = vpack.c.b16 %v418, %v417
        %v441 = vpack.c.b16 %v420, %v419
        %v442 = vpack.c.b16 %v422, %v421
        %v443 = vpack.c.b16 %v424, %v423
        %v444 = vpack.c.b16 %v426, %v425
        %v445 = vpack.c.b16 %v428, %v427
        %v446 = vpack.c.b16 %v430, %v429
        %463 = vmatpush.bf16.msra.mxu0 %v438
        %464 = vmatpush.bf16.msra.mxu0 %v437
        %465 = vmatpush.bf16.msra.mxu0 %v436
        %466 = vmatpush.bf16.msra.mxu0 %v435
        %467 = vmatpush.bf16.msra.mxu0 %v434
        %468 = vmatpush.bf16.msra.mxu0 %v433
        %469 = vmatpush.bf16.msra.mxu0 %v432
        %470 = vmatpush.bf16.msra.mxu0 %v431
        %471 = vmatmul.bf16.gmra.mxu0 %v315
        %v472 = vpop.f32.mrf.mxu0
        %v473 = vadd.f32 %v365, %v472
        %v474 = vpop.f32.mrf.mxu0
        %v475 = vadd.f32 %v365, %v474
        %476 = vmatmul.bf16.gmra.mxu0 %v317
        %v477 = vpop.f32.mrf.mxu0
        %v478 = vadd.f32 %v365, %v477
        %v479 = vpop.f32.mrf.mxu0
        %v480 = vadd.f32 %v365, %v479
        %481 = vmatmul.bf16.gmra.mxu0 %v319
        %v482 = vpop.f32.mrf.mxu0
        %v483 = vadd.f32 %v365, %v482
        %v484 = vpop.f32.mrf.mxu0
        %v485 = vadd.f32 %v365, %v484
        %486 = vmatmul.bf16.gmra.mxu0 %v321
        %v487 = vpop.f32.mrf.mxu0
        %v488 = vadd.f32 %v365, %v487
        %v489 = vpop.f32.mrf.mxu0
        %v490 = vadd.f32 %v365, %v489
        %491 = vmatmul.bf16.gmra.mxu0 %v323
        %v492 = vpop.f32.mrf.mxu0
        %v493 = vadd.f32 %v365, %v492
        %v494 = vpop.f32.mrf.mxu0
        %v495 = vadd.f32 %v365, %v494
        %496 = vmatmul.bf16.gmra.mxu0 %v325
        %v497 = vpop.f32.mrf.mxu0
        %v498 = vadd.f32 %v365, %v497
        %v499 = vpop.f32.mrf.mxu0
        %v500 = vadd.f32 %v365, %v499
        %501 = vmatmul.bf16.gmra.mxu0 %v327
        %v502 = vpop.f32.mrf.mxu0
        %v503 = vadd.f32 %v365, %v502
        %v504 = vpop.f32.mrf.mxu0
        %v505 = vadd.f32 %v365, %v504
        %506 = vmatmul.bf16.gmra.mxu0 %v329
        %v507 = vpop.f32.mrf.mxu0
        %v508 = vadd.f32 %v365, %v507
        %v509 = vpop.f32.mrf.mxu0
        %v510 = vadd.f32 %v365, %v509
        %511 = vdwg.mxu0
        %512 = vmatpush.bf16.msra.mxu0 %v446
        %513 = vmatpush.bf16.msra.mxu0 %v445
        %514 = vmatpush.bf16.msra.mxu0 %v444
        %515 = vmatpush.bf16.msra.mxu0 %v443
        %516 = vmatpush.bf16.msra.mxu0 %v442
        %517 = vmatpush.bf16.msra.mxu0 %v441
        %518 = vmatpush.bf16.msra.mxu0 %v440
        %519 = vmatpush.bf16.msra.mxu0 %v439
        %520 = vmatmul.bf16.gmra.mxu0 %v316
        %v521 = vpop.f32.mrf.mxu0
        %v522 = vadd.f32 %v473, %v521
        %v523 = vpop.f32.mrf.mxu0
        %v524 = vadd.f32 %v475, %v523
        %525 = vmatmul.bf16.gmra.mxu0 %v318
        %v526 = vpop.f32.mrf.mxu0
        %v527 = vadd.f32 %v478, %v526
        %v528 = vpop.f32.mrf.mxu0
        %v529 = vadd.f32 %v480, %v528
        %530 = vmatmul.bf16.gmra.mxu0 %v320
        %v531 = vpop.f32.mrf.mxu0
        %v532 = vadd.f32 %v483, %v531
        %v533 = vpop.f32.mrf.mxu0
        %v534 = vadd.f32 %v485, %v533
        %535 = vmatmul.bf16.gmra.mxu0 %v322
        %v536 = vpop.f32.mrf.mxu0
        %v537 = vadd.f32 %v488, %v536
        %v538 = vpop.f32.mrf.mxu0
        %v539 = vadd.f32 %v490, %v538
        %540 = vmatmul.bf16.gmra.mxu0 %v324
        %v541 = vpop.f32.mrf.mxu0
        %v542 = vadd.f32 %v493, %v541
        %v543 = vpop.f32.mrf.mxu0
        %v544 = vadd.f32 %v495, %v543
        %545 = vmatmul.bf16.gmra.mxu0 %v326
        %v546 = vpop.f32.mrf.mxu0
        %v547 = vadd.f32 %v498, %v546
        %v548 = vpop.f32.mrf.mxu0
        %v549 = vadd.f32 %v500, %v548
        %550 = vmatmul.bf16.gmra.mxu0 %v328
        %v551 = vpop.f32.mrf.mxu0
        %v552 = vadd.f32 %v503, %v551
        %v553 = vpop.f32.mrf.mxu0
        %v554 = vadd.f32 %v505, %v553
        %555 = vmatmul.bf16.gmra.mxu0 %v330
        %v556 = vpop.f32.mrf.mxu0
        %v557 = vadd.f32 %v508, %v556
        %v558 = vpop.f32.mrf.mxu0
        %v559 = vadd.f32 %v510, %v558
        %560 = vdwg.mxu0
        %v561 = vmax.f32 %v522, 0.0
        %v562 = vmax.f32 %v524, 0.0
        %v563 = vmax.f32 %v527, 0.0
        %v564 = vmax.f32 %v529, 0.0
        %v565 = vmax.f32 %v532, 0.0
        %v566 = vmax.f32 %v534, 0.0
        %v567 = vmax.f32 %v537, 0.0
        %v568 = vmax.f32 %v539, 0.0
        %v569 = vmax.f32 %v542, 0.0
        %v570 = vmax.f32 %v544, 0.0
        %v571 = vmax.f32 %v547, 0.0
        %v572 = vmax.f32 %v549, 0.0
        %v573 = vmax.f32 %v552, 0.0
        %v574 = vmax.f32 %v554, 0.0
        %v575 = vmax.f32 %v557, 0.0
        %v576 = vmax.f32 %v559, 0.0
        %v577 = vpack.c.bf16 %v562, %v561
        %v578 = vpack.c.bf16 %v564, %v563
        %v579 = vpack.c.bf16 %v566, %v565
        %v580 = vpack.c.bf16 %v568, %v567
        %v581 = vpack.c.bf16 %v570, %v569
        %v582 = vpack.c.bf16 %v572, %v571
        %v583 = vpack.c.bf16 %v574, %v573
        %v584 = vpack.c.bf16 %v576, %v575
        %v585 = vld [vmem:[#allocation6] sm:$0xf]
        %v586 = vld [vmem:[#allocation6 + $0x4] sm:$0xf]
        %v587 = vld [vmem:[#allocation6 + $0x8] sm:$0xf]
        %v588 = vld [vmem:[#allocation6 + $0xc] sm:$0xf]
        %v589 = vld [vmem:[#allocation6 + $0x10] sm:$0xf]
        %v590 = vld [vmem:[#allocation6 + $0x14] sm:$0xf]
        %v591 = vld [vmem:[#allocation6 + $0x18] sm:$0xf]
        %v592 = vld [vmem:[#allocation6 + $0x1c] sm:$0xf]
        %v593 = vld [vmem:[#allocation6 + $0x20] sm:$0xf]
        %v594 = vld [vmem:[#allocation6 + $0x24] sm:$0xf]
        %v595 = vld [vmem:[#allocation6 + $0x28] sm:$0xf]
        %v596 = vld [vmem:[#allocation6 + $0x2c] sm:$0xf]
        %v597 = vld [vmem:[#allocation6 + $0x30] sm:$0xf]
        %v598 = vld [vmem:[#allocation6 + $0x34] sm:$0xf]
        %v599 = vld [vmem:[#allocation6 + $0x38] sm:$0xf]
        %v600 = vld [vmem:[#allocation6 + $0x3c] sm:$0xf]
        %v601 = vld [vmem:[%s4] sm:$0x1]
        %v603 = vperm.slane %v601, 0
        %v621 = vunpack.c.l.b16 %v585
        %v622 = vunpack.c.l.b16 %v586
        %v623 = vunpack.c.l.b16 %v587
        %v624 = vunpack.c.l.b16 %v588
        %v625 = vunpack.c.l.b16 %v589
        %v626 = vunpack.c.l.b16 %v590
        %v627 = vunpack.c.l.b16 %v591
        %v628 = vunpack.c.l.b16 %v592
        %v629 = vunpack.c.l.b16 %v593
        %v630 = vunpack.c.l.b16 %v594
        %v631 = vunpack.c.l.b16 %v595
        %v632 = vunpack.c.l.b16 %v596
        %v633 = vunpack.c.l.b16 %v597
        %v634 = vunpack.c.l.b16 %v598
        %v635 = vunpack.c.l.b16 %v599
        %v636 = vunpack.c.l.b16 %v600
        %v637 = vpack.c.b16 %v622, %v621
        %v638 = vpack.c.b16 %v624, %v623
        %v639 = vpack.c.b16 %v626, %v625
        %v640 = vpack.c.b16 %v628, %v627
        %v641 = vpack.c.b16 %v630, %v629
        %v642 = vpack.c.b16 %v632, %v631
        %v643 = vpack.c.b16 %v634, %v633
        %v644 = vpack.c.b16 %v636, %v635
        %653 = vmatpush.bf16.msra.mxu0 %v644
        %654 = vmatpush.bf16.msra.mxu0 %v643
        %655 = vmatpush.bf16.msra.mxu0 %v642
        %656 = vmatpush.bf16.msra.mxu0 %v641
        %657 = vmatpush.bf16.msra.mxu0 %v640
        %658 = vmatpush.bf16.msra.mxu0 %v639
        %659 = vmatpush.bf16.msra.mxu0 %v638
        %660 = vmatpush.bf16.msra.mxu0 %v637
        %661 = vmatmul.bf16.gmra.mxu0 %v577
        %v662 = vpop.f32.mrf.mxu0
        %v663 = vadd.f32 %v603, %v662
        %v664 = vpop.f32.mrf.mxu0
        %v665 = vadd.f32 %v603, %v664
        %666 = vmatmul.bf16.gmra.mxu0 %v578
        %v667 = vpop.f32.mrf.mxu0
        %v668 = vadd.f32 %v603, %v667
        %v669 = vpop.f32.mrf.mxu0
        %v670 = vadd.f32 %v603, %v669
        %671 = vmatmul.bf16.gmra.mxu0 %v579
        %v672 = vpop.f32.mrf.mxu0
        %v673 = vadd.f32 %v603, %v672
        %v674 = vpop.f32.mrf.mxu0
        %v675 = vadd.f32 %v603, %v674
        %676 = vmatmul.bf16.gmra.mxu0 %v580
        %v677 = vpop.f32.mrf.mxu0
        %v678 = vadd.f32 %v603, %v677
        %v679 = vpop.f32.mrf.mxu0
        %v680 = vadd.f32 %v603, %v679
        %681 = vmatmul.bf16.gmra.mxu0 %v581
        %v682 = vpop.f32.mrf.mxu0
        %v683 = vadd.f32 %v603, %v682
        %v684 = vpop.f32.mrf.mxu0
        %v685 = vadd.f32 %v603, %v684
        %686 = vmatmul.bf16.gmra.mxu0 %v582
        %v687 = vpop.f32.mrf.mxu0
        %v688 = vadd.f32 %v603, %v687
        %v689 = vpop.f32.mrf.mxu0
        %v690 = vadd.f32 %v603, %v689
        %691 = vmatmul.bf16.gmra.mxu0 %v583
        %v692 = vpop.f32.mrf.mxu0
        %v693 = vadd.f32 %v603, %v692
        %v694 = vpop.f32.mrf.mxu0
        %v695 = vadd.f32 %v603, %v694
        %696 = vmatmul.bf16.gmra.mxu0 %v584
        %v697 = vpop.f32.mrf.mxu0
        %v698 = vadd.f32 %v603, %v697
        %v699 = vpop.f32.mrf.mxu0
        %v700 = vadd.f32 %v603, %v699
        %701 = vdwg.mxu0
        %702 = vmax.xlane.f32.xlu0 %v663
        %v703 = vpop.xlane.xlu0 %702
        %704 = vmax.xlane.f32.xlu0 %v665
        %v705 = vpop.xlane.xlu0 %704
        %706 = vmax.xlane.f32.xlu0 %v668
        %v707 = vpop.xlane.xlu0 %706
        %708 = vmax.xlane.f32.xlu0 %v670
        %v709 = vpop.xlane.xlu0 %708
        %710 = vmax.xlane.f32.xlu0 %v673
        %v711 = vpop.xlane.xlu0 %710
        %712 = vmax.xlane.f32.xlu0 %v675
        %v713 = vpop.xlane.xlu0 %712
        %714 = vmax.xlane.f32.xlu0 %v678
        %v715 = vpop.xlane.xlu0 %714
        %716 = vmax.xlane.f32.xlu0 %v680
        %v717 = vpop.xlane.xlu0 %716
        %718 = vmax.xlane.f32.xlu0 %v683
        %v719 = vpop.xlane.xlu0 %718
        %720 = vmax.xlane.f32.xlu0 %v685
        %v721 = vpop.xlane.xlu0 %720
        %722 = vmax.xlane.f32.xlu0 %v688
        %v723 = vpop.xlane.xlu0 %722
        %724 = vmax.xlane.f32.xlu0 %v690
        %v725 = vpop.xlane.xlu0 %724
        %726 = vmax.xlane.f32.xlu0 %v693
        %v727 = vpop.xlane.xlu0 %726
        %728 = vmax.xlane.f32.xlu0 %v695
        %v729 = vpop.xlane.xlu0 %728
        %730 = vmax.xlane.f32.xlu0 %v698
        %v731 = vpop.xlane.xlu0 %730
        %732 = vmax.xlane.f32.xlu0 %v700
        %v733 = vpop.xlane.xlu0 %732
        %v734 = vsub.f32 %v663, %v703
        %v735 = vsub.f32 %v665, %v705
        %v736 = vsub.f32 %v668, %v707
        %v737 = vsub.f32 %v670, %v709
        %v738 = vsub.f32 %v673, %v711
        %v739 = vsub.f32 %v675, %v713
        %v740 = vsub.f32 %v678, %v715
        %v741 = vsub.f32 %v680, %v717
        %v742 = vsub.f32 %v683, %v719
        %v743 = vsub.f32 %v685, %v721
        %v744 = vsub.f32 %v688, %v723
        %v745 = vsub.f32 %v690, %v725
        %v746 = vsub.f32 %v693, %v727
        %v747 = vsub.f32 %v695, %v729
        %v748 = vsub.f32 %v698, %v731
        %v749 = vsub.f32 %v700, %v733
        %v750 = vmul.f32 %v734, 1.442695
        %v751 = vpow.pop %v750
        %v752 = vmul.f32 %v735, 1.442695
        %v753 = vpow.pop %v752
        %v754 = vmul.f32 %v736, 1.442695
        %v755 = vpow.pop %v754
        %v756 = vmul.f32 %v737, 1.442695
        %v757 = vpow.pop %v756
        %v758 = vmul.f32 %v738, 1.442695
        %v759 = vpow.pop %v758
        %v760 = vmul.f32 %v739, 1.442695
        %v761 = vpow.pop %v760
        %v762 = vmul.f32 %v740, 1.442695
        %v763 = vpow.pop %v762
        %v764 = vmul.f32 %v741, 1.442695
        %v765 = vpow.pop %v764
        %v766 = vmul.f32 %v742, 1.442695
        %v767 = vpow.pop %v766
        %v768 = vmul.f32 %v743, 1.442695
        %v769 = vpow.pop %v768
        %v770 = vmul.f32 %v744, 1.442695
        %v771 = vpow.pop %v770
        %v772 = vmul.f32 %v745, 1.442695
        %v773 = vpow.pop %v772
        %v774 = vmul.f32 %v746, 1.442695
        %v775 = vpow.pop %v774
        %v776 = vmul.f32 %v747, 1.442695
        %v777 = vpow.pop %v776
        %v778 = vmul.f32 %v748, 1.442695
        %v779 = vpow.pop %v778
        %v780 = vmul.f32 %v749, 1.442695
        %v781 = vpow.pop %v780
        %782 = vadd.xlane.f32.xlu0 %v751
        %v783 = vpop.xlane.xlu0 %782
        %784 = vadd.xlane.f32.xlu0 %v753
        %v785 = vpop.xlane.xlu0 %784
        %786 = vadd.xlane.f32.xlu0 %v755
        %v787 = vpop.xlane.xlu0 %786
        %788 = vadd.xlane.f32.xlu0 %v757
        %v789 = vpop.xlane.xlu0 %788
        %790 = vadd.xlane.f32.xlu0 %v759
        %v791 = vpop.xlane.xlu0 %790
        %792 = vadd.xlane.f32.xlu0 %v761
        %v793 = vpop.xlane.xlu0 %792
        %794 = vadd.xlane.f32.xlu0 %v763
        %v795 = vpop.xlane.xlu0 %794
        %796 = vadd.xlane.f32.xlu0 %v765
        %v797 = vpop.xlane.xlu0 %796
        %798 = vadd.xlane.f32.xlu0 %v767
        %v799 = vpop.xlane.xlu0 %798
        %800 = vadd.xlane.f32.xlu0 %v769
        %v801 = vpop.xlane.xlu0 %800
        %802 = vadd.xlane.f32.xlu0 %v771
        %v803 = vpop.xlane.xlu0 %802
        %804 = vadd.xlane.f32.xlu0 %v773
        %v805 = vpop.xlane.xlu0 %804
        %806 = vadd.xlane.f32.xlu0 %v775
        %v807 = vpop.xlane.xlu0 %806
        %808 = vadd.xlane.f32.xlu0 %v777
        %v809 = vpop.xlane.xlu0 %808
        %810 = vadd.xlane.f32.xlu0 %v779
        %v811 = vpop.xlane.xlu0 %810
        %812 = vadd.xlane.f32.xlu0 %v781
        %v813 = vpop.xlane.xlu0 %812
        %v814 = vlog2.pop %v783
        %v815 = vmul.f32 %v814, 0.6931472
        %v816 = vlog2.pop %v785
        %v817 = vmul.f32 %v816, 0.6931472
        %v818 = vlog2.pop %v787
        %v819 = vmul.f32 %v818, 0.6931472
        %v820 = vlog2.pop %v789
        %v821 = vmul.f32 %v820, 0.6931472
        %v822 = vlog2.pop %v791
        %v823 = vmul.f32 %v822, 0.6931472
        %v824 = vlog2.pop %v793
        %v825 = vmul.f32 %v824, 0.6931472
        %v826 = vlog2.pop %v795
        %v827 = vmul.f32 %v826, 0.6931472
        %v828 = vlog2.pop %v797
        %v829 = vmul.f32 %v828, 0.6931472
        %v830 = vlog2.pop %v799
        %v831 = vmul.f32 %v830, 0.6931472
        %v832 = vlog2.pop %v801
        %v833 = vmul.f32 %v832, 0.6931472
        %v834 = vlog2.pop %v803
        %v835 = vmul.f32 %v834, 0.6931472
        %v836 = vlog2.pop %v805
        %v837 = vmul.f32 %v836, 0.6931472
        %v838 = vlog2.pop %v807
        %v839 = vmul.f32 %v838, 0.6931472
        %v840 = vlog2.pop %v809
        %v841 = vmul.f32 %v840, 0.6931472
        %v842 = vlog2.pop %v811
        %v843 = vmul.f32 %v842, 0.6931472
        %v844 = vlog2.pop %v813
        %v845 = vmul.f32 %v844, 0.6931472
        %v846 = vsub.f32 %v734, %v815
        %v847 = vsub.f32 %v735, %v817
        %v848 = vsub.f32 %v736, %v819
        %v849 = vsub.f32 %v737, %v821
        %v850 = vsub.f32 %v738, %v823
        %v851 = vsub.f32 %v739, %v825
        %v852 = vsub.f32 %v740, %v827
        %v853 = vsub.f32 %v741, %v829
        %v854 = vsub.f32 %v742, %v831
        %v855 = vsub.f32 %v743, %v833
        %v856 = vsub.f32 %v744, %v835
        %v857 = vsub.f32 %v745, %v837
        %v858 = vsub.f32 %v746, %v839
        %v859 = vsub.f32 %v747, %v841
        %v860 = vsub.f32 %v748, %v843
        %v861 = vsub.f32 %v749, %v845
        %862 = vst [vmem:[%s281] sm:$0xff] %v846
        %863 = vst [vmem:[%s281 + $0x8] sm:$0xff] %v847
        %864 = vst [vmem:[%s281 + $0x10] sm:$0xff] %v848
        %865 = vst [vmem:[%s281 + $0x18] sm:$0xff] %v849
        %866 = vst [vmem:[%s281 + $0x20] sm:$0xff] %v850
        %867 = vst [vmem:[%s281 + $0x28] sm:$0xff] %v851
        %868 = vst [vmem:[%s281 + $0x30] sm:$0xff] %v852
        %869 = vst [vmem:[%s281 + $0x38] sm:$0xff] %v853
        %870 = vst [vmem:[%s281 + $0x40] sm:$0xff] %v854
        %871 = vst [vmem:[%s281 + $0x48] sm:$0xff] %v855
        %872 = vst [vmem:[%s281 + $0x50] sm:$0xff] %v856
        %873 = vst [vmem:[%s281 + $0x58] sm:$0xff] %v857
        %874 = vst [vmem:[%s281 + $0x60] sm:$0xff] %v858
        %875 = vst [vmem:[%s281 + $0x68] sm:$0xff] %v859
        %876 = vst [vmem:[%s281 + $0x70] sm:$0xff] %v860
        %877 = vst [vmem:[%s281 + $0x78] sm:$0xff] %v861
        %s878 = smul.u32 16, %s20
        %p879 = scmp.lt.s32.totalorder %s878, 31
        %s880 = scalar_select %p879, %s878, 31
        %s881 = smul.addr %s880, 8
        %s882 = scalar_lea.vmem %s5, %s881
        // Predicated region
        $region53: #{classification_model_forward.1} parent=39 // pred_check
          %p883 = pneg %p148
        $region54: #{classification_model_forward.1} parent=39 // pred_check_branch
          %885 = sbr.rel (%p883) target = $region56
        $region55: #{classification_model_forward.1} parent=39 // pred_region
          %s886 = smul.u32 16, %s20
        $region56: #{classification_model_forward.1} parent=39 // pred_fallthru
          _
      $region40: #{classification_model_forward.1} parent=5 // pred_fallthru
        _
      %p887 = scmp.le.s32.totalorder 2, %s15
      // Predicated region
      $region57: #{classification_model_forward.1} parent=5 // pred_check
        %p888 = pneg %p887
      $region58: #{classification_model_forward.1} parent=5 // pred_check_branch
        %890 = sbr.rel (%p888) target = $region60
      $region59: #{classification_model_forward.1} parent=5 // pred_region
        %s891 = ssub.s32 %s15, 2
        // Predicated region
        $region61: #{classification_model_forward.1} parent=59 // pred_check
          %p892 = pneg %p154
        $region62: #{classification_model_forward.1} parent=59 // pred_check_branch
          %894 = sbr.rel (%p892) target = $region64
        $region63: #{classification_model_forward.1} parent=59 // pred_region
          %s895 = smul.u32 16, %s21
          %p896 = scmp.lt.s32.totalorder %s895, 31
          %s897 = scalar_select %p896, %s895, 31
          %s898 = smul.addr %s897, 8
          %s899 = scalar_lea.vmem %s5, %s898
        $region64: #{classification_model_forward.1} parent=59 // pred_fallthru
          _
      $region60: #{classification_model_forward.1} parent=5 // pred_fallthru
        _
    $region6: #{classification_model_forward.1} parent=1 // loop_footer
      %s19 = sadd.s32 1, %s15
    $region7: #{classification_model_forward.1} parent=1 // loop_footer_branch
      %14 = sbr.rel target = $region3
    $region8: #{classification_model_forward.1} parent=1 // loop_exit
      _
    %900 = vsyncpa [#allocation3], 1
    %s901 = scalar_lea.sflag [#allocation3], 1
    %902 = vsyncpa %s901, 1
    %903 = vsyncpa [#allocation5], 1

</llo_original>
